<compile_context>
chip_gen: v5e
topology: v5e:2x2
jax: 0.10.0
libtpu: 0.0.40
codegen_flags: <defaults>
</compile_context>

<pallas_src>
import functools
import math

import jax
import jax.numpy as jnp
from jax.experimental import pallas as pl
from jax.experimental.pallas import tpu as pltpu

# ---- "config" constants (deterministic stand-ins for get_config()) ----------
MSE_WEIGHT = 0.7
MAPE_WEIGHT = 0.3
MAPE_EPSILON = 1e-8
MAPE_CLIP_PERCENTAGE = 100.0  # -> clip_mape_fraction = 1.0
CLIP_MAPE_FRACTION = MAPE_CLIP_PERCENTAGE / 100.0

_LANES = 128
_SUBLANES = 8


def _round_up(x, m):
    return ((x + m - 1) // m) * m


def _vmem_capacity_bytes():
    """Per-core VMEM capacity; conservative (v7x = 64 MiB) if query fails."""
    try:
        info = pltpu.get_tpu_info()
        cap = getattr(info, "vmem_capacity_bytes", None)
        if cap:
            return int(cap)
    except Exception:
        pass
    return 64 << 20


def _combined_loss_kernel(pred_ref, true_ref, sq_out_ref, ape_out_ref,
                          acc_sq, acc_ape, *, value_aware, value_multiplier, acc_k):
    """One grid step: accumulate per-(K, sublane, lane) partial sums.

    acc_sq / acc_ape (VMEM, (K, 8, 128) f32): partial sums of (weighted) squared
        error and clamped abs-percentage-error.  K independent accumulator slabs
        break the serial dependent-add chain of a single (8,128) accumulator.
    sq_out_ref / ape_out_ref ((1, K, 8, 128) output blocks): this parallel
        block's partials, written on the last reduction step.
    """
    r = pl.program_id(1)

    @pl.when(r == 0)
    def _init():
        acc_sq[...] = jnp.zeros_like(acc_sq)
        acc_ape[...] = jnp.zeros_like(acc_ape)

    # TODO(synk): optional bf16 compute path for diff/abs on v6e/v7x (packed VPU)
    # skipped to keep bit-level behaviour close to the f32 PyTorch reference.
    y_pred = pred_ref[...].astype(jnp.float32)
    y_true = true_ref[...].astype(jnp.float32)

    diff = y_true - y_pred
    abs_true = jnp.abs(y_true)  # hoisted: reused for value weight and APE denominator

    sq_err = diff * diff
    if value_aware:
        # value_weights = 1 + |y_true| * value_multiplier  (weighted MSE)
        sq_err = (1.0 + abs_true * jnp.float32(value_multiplier)) * sq_err

    # Approx reciprocal -> EUP slot (own VLIW slot), keeps the VPU free.
    inv_den = pl.reciprocal(abs_true + jnp.float32(MAPE_EPSILON), approx=True)
    ape = jnp.minimum(jnp.abs(diff) * inv_den, jnp.float32(CLIP_MAPE_FRACTION))

    tr = sq_err.shape[0]
    folds = tr // (_SUBLANES * acc_k)
    # Fold rows onto K independent (sublane, lane) accumulator slabs:
    # pure vreg-to-vreg VPU adds, K parallel chains of length `folds`.
    acc_sq[...] += sq_err.reshape(folds, acc_k, _SUBLANES, _LANES).sum(axis=0)
    acc_ape[...] += ape.reshape(folds, acc_k, _SUBLANES, _LANES).sum(axis=0)

    @pl.when(r == pl.num_programs(1) - 1)
    def _finalize():
        sq_out_ref[0] = acc_sq[...]
        ape_out_ref[0] = acc_ape[...]


def combined_loss(y_pred, y_true, *, loss_mode="standard", value_multiplier=0.01,
                  max_tile_bytes=None):
    """Pallas implementation of CombinedLoss.forward. Returns a scalar f32."""
    if loss_mode not in ("standard", "value_aware"):
        raise ValueError(f"loss_mode must be 'standard' or 'value_aware', got {loss_mode}")
    if value_multiplier is None:
        value_multiplier = 0.01
    assert y_pred.shape == y_true.shape

    n_elems = math.prod(y_pred.shape)
    assert n_elems > 0
    itemsize = max(jnp.dtype(y_pred.dtype).itemsize, jnp.dtype(y_true.dtype).itemsize)
    sublane_min = _SUBLANES * max(1, 4 // itemsize)  # f32: 8, bf16: 16, int8/fp8: 32
    row_bytes = _LANES * itemsize

    # --- per-generation block sizing ----------------------------------------
    # Keep (2 inputs x 2 pipeline buffers) x block comfortably inside per-core
    # VMEM (v5e/v6e: 128 MiB, v7x: 64 MiB), capped at 8 MiB per input block.
    vmem_cap = _vmem_capacity_bytes()
    if max_tile_bytes is None:
        max_tile_bytes = min(8 << 20, (vmem_cap * 3 // 5) // 4)
    tr_cap = max(sublane_min, (max_tile_bytes // row_bytes) // sublane_min * sublane_min)

    rows_min = -(-n_elems // _LANES)  # ceil
    tr = min(tr_cap, _round_up(rows_min, sublane_min))
    num_blocks = -(-rows_min // tr)
    if num_blocks == 1 and tr >= 2 * sublane_min:
        # Split a single block in two so the leading (per-core) axis is usable.
        tr = _round_up(-(-tr // 2), sublane_min)
        num_blocks = -(-rows_min // tr)
    num_parallel = 2 if num_blocks >= 2 else 1
    num_blocks = _round_up(num_blocks, num_parallel)
    rpb = num_blocks // num_parallel  # reduction steps per parallel block
    padded_rows = num_blocks * tr

    # K independent accumulator chains (break the serial add chain).
    acc_k = next(k for k in (4, 2, 1) if tr % (_SUBLANES * k) == 0)

    # --- zero-pad to the tiled shape (zeros contribute 0 to both sums) -------
    flat_p = y_pred.reshape(-1)
    flat_t = y_true.reshape(-1)
    pad = padded_rows * _LANES - n_elems
    if pad:
        flat_p = jnp.pad(flat_p, (0, pad))
        flat_t = jnp.pad(flat_t, (0, pad))
    yp2 = flat_p.reshape(padded_rows, _LANES)
    yt2 = flat_t.reshape(padded_rows, _LANES)

    value_aware = loss_mode == "value_aware"
    kernel = functools.partial(
        _combined_loss_kernel,
        value_aware=value_aware,
        value_multiplier=float(value_multiplier),
        acc_k=acc_k,
    )

    block_bytes = tr * row_bytes
    # Scoped-VMEM request sized to the double-buffered footprint (+margin), so
    # the big blocks compile on every generation without blowing physical VMEM.
    vmem_limit = int(min(vmem_cap * 9 // 10,
                         max(4 * block_bytes + (4 << 20), 16 << 20)))

    out_bytes = 2 * num_parallel * acc_k * _SUBLANES * _LANES * 4
    cost = pl.CostEstimate(
        flops=(11 if value_aware else 8) * n_elems,
        transcendentals=n_elems,  # approx reciprocal on the EUP
        bytes_accessed=2 * padded_rows * _LANES * itemsize + out_bytes,
    )

    out_shape = (
        jax.ShapeDtypeStruct((num_parallel, acc_k, _SUBLANES, _LANES), jnp.float32),
        jax.ShapeDtypeStruct((num_parallel, acc_k, _SUBLANES, _LANES), jnp.float32),
    )
    grid_spec = pltpu.PrefetchScalarGridSpec(
        num_scalar_prefetch=0,
        grid=(num_parallel, rpb),
        in_specs=[
            pl.BlockSpec((tr, _LANES), lambda p, r: (p * rpb + r, 0)),
            pl.BlockSpec((tr, _LANES), lambda p, r: (p * rpb + r, 0)),
        ],
        out_specs=[
            pl.BlockSpec((1, acc_k, _SUBLANES, _LANES), lambda p, r: (p, 0, 0, 0)),
            pl.BlockSpec((1, acc_k, _SUBLANES, _LANES), lambda p, r: (p, 0, 0, 0)),
        ],
        scratch_shapes=[
            pltpu.VMEM((acc_k, _SUBLANES, _LANES), jnp.float32),
            pltpu.VMEM((acc_k, _SUBLANES, _LANES), jnp.float32),
        ],
    )

    def _run(dim_sem):
        return pl.pallas_call(
            kernel,
            out_shape=out_shape,
            grid_spec=grid_spec,
            compiler_params=pltpu.CompilerParams(
                dimension_semantics=dim_sem,
                vmem_limit_bytes=vmem_limit,
            ),
            cost_estimate=cost,
        )(yp2, yt2)

    partials = None
    if num_parallel > 1:
        # Explicit per-TensorCore sharding of the leading axis (real 2-TC split
        # on v7x); fall back to plain "parallel" if this generation rejects it.
        try:
            partials = jax.block_until_ready(
                _run((pltpu.CORE_PARALLEL, pltpu.ARBITRARY)))
        except Exception:
            partials = None
    if partials is None:
        partials = _run(("parallel", "arbitrary"))

    partials_sq, partials_ape = partials
    # Tiny final combine in plain JAX (one cross-lane reduce for the whole kernel).
    inv_n = jnp.float32(1.0 / n_elems)
    mse = jnp.sum(partials_sq) * inv_n
    mape_frac = jnp.sum(partials_ape) * inv_n  # mape = mean(ape)*100; loss uses mape/100
    return jnp.float32(MSE_WEIGHT) * mse + jnp.float32(MAPE_WEIGHT) * mape_frac


def _combined_loss_ref(y_pred, y_true, *, loss_mode="standard", value_multiplier=0.01):
    """Pure-JAX reference mirroring the PyTorch module."""
    yp = y_pred.astype(jnp.float32)
    yt = y_true.astype(jnp.float32)
    diff = yt - yp
    if loss_mode == "value_aware":
        mse = jnp.mean((1.0 + jnp.abs(yt) * value_multiplier) * diff * diff)
    else:
        mse = jnp.mean(diff * diff)
    ape = jnp.abs(diff / (jnp.abs(yt) + MAPE_EPSILON))
    ape = jnp.minimum(ape, CLIP_MAPE_FRACTION)
    mape = jnp.mean(ape) * 100.0
    return MSE_WEIGHT * mse + MAPE_WEIGHT * (mape / 100.0)


if __name__ == "__main__":
    key = jax.random.PRNGKey(0)
    k1, k2 = jax.random.split(key)
    # Small loss-input shape: batch=256 predictions with 128 targets each.
    shape = (256, 128)
    y_true = jax.random.uniform(k1, shape, dtype=jnp.float32) * 5.0
    y_pred = y_true + 0.3 * jax.random.normal(k2, shape, dtype=jnp.float32)

    ok = True
    for mode in ("standard", "value_aware"):
        out = combined_loss(y_pred, y_true, loss_mode=mode, value_multiplier=0.01)
        out = jax.block_until_ready(out)
        ref = _combined_loss_ref(y_pred, y_true, loss_mode=mode, value_multiplier=0.01)
        # Tolerance accounts for the EUP approx reciprocal in the (clipped,
        # averaged) MAPE term; loss-level error is O(1e-4) relative at worst.
        ok = ok and bool(jnp.allclose(out, ref, rtol=2e-3, atol=1e-5))

    if ok:
        print("KERNEL_OK")
    else:
        print("KERNEL_MISMATCH")
</pallas_src>

<mosaic_0001>
module attributes {stable_mosaic.version = 11 : i64} {
  func.func @_combined_loss_kernel(%arg0: i32, %arg1: i32, %arg2: memref<128x128xf32, #tpu.memory_space<vmem>>, %arg3: memref<128x128xf32, #tpu.memory_space<vmem>>, %arg4: memref<1x4x8x128xf32, #tpu.memory_space<vmem>>, %arg5: memref<1x4x8x128xf32, #tpu.memory_space<vmem>>, %arg6: memref<4x8x128xf32, #tpu.memory_space<vmem>>, %arg7: memref<4x8x128xf32, #tpu.memory_space<vmem>>) attributes {dimension_semantics = [#tpu.dimension_semantics<core_parallel>, #tpu.dimension_semantics<arbitrary>], iteration_bounds = array<i64: 2, 1>, scalar_prefetch = 0 : i64, scratch_operands = 2 : i64, tpu.core_type = #tpu.core_type<tc>, window_params = [{transform_indices = @transform_0, window_bounds = array<i64: 128, 128>}, {transform_indices = @transform_1, window_bounds = array<i64: 128, 128>}, {transform_indices = @transform_2, window_bounds = array<i64: 1, 4, 8, 128>}, {transform_indices = @transform_3, window_bounds = array<i64: 1, 4, 8, 128>}]} {
    %c0_i32 = arith.constant 0 : i32
    %0 = arith.cmpi eq, %arg1, %c0_i32 : i32
    %1 = arith.extui %0 : i1 to i32
    %c0_i32_0 = arith.constant 0 : i32
    %2 = arith.cmpi ne, %1, %c0_i32_0 : i32
    scf.if %2 {
      %cst_21 = arith.constant 0.000000e+00 : f32
      %28 = vector.broadcast %cst_21 : f32 to vector<4x8x128xf32>
      %c0_22 = arith.constant 0 : index
      %c0_23 = arith.constant 0 : index
      %c0_24 = arith.constant 0 : index
      %29 = vector.load %arg6[%c0_22, %c0_23, %c0_24] : memref<4x8x128xf32, #tpu.memory_space<vmem>>, vector<4x8x128xf32>
      tpu.vector_store %arg6[%c0_22, %c0_23, %c0_24], %28 {strides = array<i32>} : memref<4x8x128xf32, #tpu.memory_space<vmem>>, vector<4x8x128xf32>,
      %cst_25 = arith.constant 0.000000e+00 : f32
      %30 = vector.broadcast %cst_25 : f32 to vector<4x8x128xf32>
      %c0_26 = arith.constant 0 : index
      %c0_27 = arith.constant 0 : index
      %c0_28 = arith.constant 0 : index
      %31 = vector.load %arg7[%c0_26, %c0_27, %c0_28] : memref<4x8x128xf32, #tpu.memory_space<vmem>>, vector<4x8x128xf32>
      tpu.vector_store %arg7[%c0_26, %c0_27, %c0_28], %30 {strides = array<i32>} : memref<4x8x128xf32, #tpu.memory_space<vmem>>, vector<4x8x128xf32>,
    } else {
    }
    %c0 = arith.constant 0 : index
    %c0_1 = arith.constant 0 : index
    %3 = vector.load %arg2[%c0, %c0_1] : memref<128x128xf32, #tpu.memory_space<vmem>>, vector<128x128xf32>
    %c0_2 = arith.constant 0 : index
    %c0_3 = arith.constant 0 : index
    %4 = vector.load %arg3[%c0_2, %c0_3] : memref<128x128xf32, #tpu.memory_space<vmem>>, vector<128x128xf32>
    %5 = arith.subf %4, %3 : vector<128x128xf32>
    %6 = math.absf %4 : vector<128x128xf32>
    %7 = arith.mulf %5, %5 : vector<128x128xf32>
    %cst = arith.constant 9.99999993E-9 : f32
    %8 = vector.broadcast %cst : f32 to vector<128x128xf32>
    %9 = arith.addf %6, %8 : vector<128x128xf32>
    %10 = tpu.reciprocal %9 {approx = true} : vector<128x128xf32> -> vector<128x128xf32>
    %11 = math.absf %5 : vector<128x128xf32>
    %12 = arith.mulf %11, %10 : vector<128x128xf32>
    %cst_4 = arith.constant 1.000000e+00 : f32
    %13 = vector.broadcast %cst_4 : f32 to vector<128x128xf32>
    %14 = arith.minimumf %12, %13 : vector<128x128xf32>
    %c0_5 = arith.constant 0 : index
    %c0_6 = arith.constant 0 : index
    %c0_7 = arith.constant 0 : index
    %15 = vector.load %arg6[%c0_5, %c0_6, %c0_7] : memref<4x8x128xf32, #tpu.memory_space<vmem>>, vector<4x8x128xf32>
    %16 = vector.shape_cast %7 : vector<128x128xf32> to vector<4x4x8x128xf32>
    %cst_8 = arith.constant dense<0.000000e+00> : vector<4x8x128xf32>
    %17 = vector.multi_reduction <add>, %16, %cst_8 [0] : vector<4x4x8x128xf32> to vector<4x8x128xf32>
    %18 = arith.addf %15, %17 : vector<4x8x128xf32>
    %c0_9 = arith.constant 0 : index
    %c0_10 = arith.constant 0 : index
    %c0_11 = arith.constant 0 : index
    %19 = vector.load %arg6[%c0_9, %c0_10, %c0_11] : memref<4x8x128xf32, #tpu.memory_space<vmem>>, vector<4x8x128xf32>
    tpu.vector_store %arg6[%c0_9, %c0_10, %c0_11], %18 {strides = array<i32>} : memref<4x8x128xf32, #tpu.memory_space<vmem>>, vector<4x8x128xf32>,
    %c0_12 = arith.constant 0 : index
    %c0_13 = arith.constant 0 : index
    %c0_14 = arith.constant 0 : index
    %20 = vector.load %arg7[%c0_12, %c0_13, %c0_14] : memref<4x8x128xf32, #tpu.memory_space<vmem>>, vector<4x8x128xf32>
    %21 = vector.shape_cast %14 : vector<128x128xf32> to vector<4x4x8x128xf32>
    %cst_15 = arith.constant dense<0.000000e+00> : vector<4x8x128xf32>
    %22 = vector.multi_reduction <add>, %21, %cst_15 [0] : vector<4x4x8x128xf32> to vector<4x8x128xf32>
    %23 = arith.addf %20, %22 : vector<4x8x128xf32>
    %c0_16 = arith.constant 0 : index
    %c0_17 = arith.constant 0 : index
    %c0_18 = arith.constant 0 : index
    %24 = vector.load %arg7[%c0_16, %c0_17, %c0_18] : memref<4x8x128xf32, #tpu.memory_space<vmem>>, vector<4x8x128xf32>
    tpu.vector_store %arg7[%c0_16, %c0_17, %c0_18], %23 {strides = array<i32>} : memref<4x8x128xf32, #tpu.memory_space<vmem>>, vector<4x8x128xf32>,
    %c0_i32_19 = arith.constant 0 : i32
    %25 = arith.cmpi eq, %arg1, %c0_i32_19 : i32
    %26 = arith.extui %25 : i1 to i32
    %c0_i32_20 = arith.constant 0 : i32
    %27 = arith.cmpi ne, %26, %c0_i32_20 : i32
    scf.if %27 {
      %c0_21 = arith.constant 0 : index
      %c0_22 = arith.constant 0 : index
      %c0_23 = arith.constant 0 : index
      %28 = vector.load %arg6[%c0_21, %c0_22, %c0_23] : memref<4x8x128xf32, #tpu.memory_space<vmem>>, vector<4x8x128xf32>
      %c0_24 = arith.constant 0 : index
      %c0_25 = arith.constant 0 : index
      %c0_26 = arith.constant 0 : index
      %c0_27 = arith.constant 0 : index
      %29 = vector.load %arg4[%c0_24, %c0_25, %c0_26, %c0_27] : memref<1x4x8x128xf32, #tpu.memory_space<vmem>>, vector<1x4x8x128xf32>
      %30 = vector.shape_cast %29 : vector<1x4x8x128xf32> to vector<4x8x128xf32>
      %31 = vector.shape_cast %28 : vector<4x8x128xf32> to vector<1x4x8x128xf32>
      tpu.vector_store %arg4[%c0_24, %c0_25, %c0_26, %c0_27], %31 {strides = array<i32>} : memref<1x4x8x128xf32, #tpu.memory_space<vmem>>, vector<1x4x8x128xf32>,
      %c0_28 = arith.constant 0 : index
      %c0_29 = arith.constant 0 : index
      %c0_30 = arith.constant 0 : index
      %32 = vector.load %arg7[%c0_28, %c0_29, %c0_30] : memref<4x8x128xf32, #tpu.memory_space<vmem>>, vector<4x8x128xf32>
      %c0_31 = arith.constant 0 : index
      %c0_32 = arith.constant 0 : index
      %c0_33 = arith.constant 0 : index
      %c0_34 = arith.constant 0 : index
      %33 = vector.load %arg5[%c0_31, %c0_32, %c0_33, %c0_34] : memref<1x4x8x128xf32, #tpu.memory_space<vmem>>, vector<1x4x8x128xf32>
      %34 = vector.shape_cast %33 : vector<1x4x8x128xf32> to vector<4x8x128xf32>
      %35 = vector.shape_cast %32 : vector<4x8x128xf32> to vector<1x4x8x128xf32>
      tpu.vector_store %arg5[%c0_31, %c0_32, %c0_33, %c0_34], %35 {strides = array<i32>} : memref<1x4x8x128xf32, #tpu.memory_space<vmem>>, vector<1x4x8x128xf32>,
    } else {
    }
    return
  }
  func.func @transform_0(%arg0: i32, %arg1: i32) -> (i32, i32) {
    %c1_i32 = arith.constant 1 : i32
    %0 = arith.muli %arg0, %c1_i32 : i32
    %1 = arith.addi %0, %arg1 : i32
    %c0_i32 = arith.constant 0 : i32
    %c0_i32_0 = arith.constant 0 : i32
    return %1, %c0_i32 : i32, i32
  }
  func.func @transform_1(%arg0: i32, %arg1: i32) -> (i32, i32) {
    %c1_i32 = arith.constant 1 : i32
    %0 = arith.muli %arg0, %c1_i32 : i32
    %1 = arith.addi %0, %arg1 : i32
    %c0_i32 = arith.constant 0 : i32
    %c0_i32_0 = arith.constant 0 : i32
    return %1, %c0_i32 : i32, i32
  }
  func.func @transform_2(%arg0: i32, %arg1: i32) -> (i32, i32, i32, i32) {
    %c0_i32 = arith.constant 0 : i32
    %c0_i32_0 = arith.constant 0 : i32
    %c0_i32_1 = arith.constant 0 : i32
    %c0_i32_2 = arith.constant 0 : i32
    return %arg0, %c0_i32, %c0_i32_0, %c0_i32_1 : i32, i32, i32, i32
  }
  func.func @transform_3(%arg0: i32, %arg1: i32) -> (i32, i32, i32, i32) {
    %c0_i32 = arith.constant 0 : i32
    %c0_i32_0 = arith.constant 0 : i32
    %c0_i32_1 = arith.constant 0 : i32
    %c0_i32_2 = arith.constant 0 : i32
    return %arg0, %c0_i32, %c0_i32_0, %c0_i32_1 : i32, i32, i32, i32
  }
}

module attributes {stable_mosaic.version = 11 : i64} {
  func.func @_combined_loss_kernel(%arg0: i32, %arg1: i32, %arg2: memref<128x128xf32, #tpu.memory_space<vmem>>, %arg3: memref<128x128xf32, #tpu.memory_space<vmem>>, %arg4: memref<1x4x8x128xf32, #tpu.memory_space<vmem>>, %arg5: memref<1x4x8x128xf32, #tpu.memory_space<vmem>>, %arg6: memref<4x8x128xf32, #tpu.memory_space<vmem>>, %arg7: memref<4x8x128xf32, #tpu.memory_space<vmem>>) attributes {dimension_semantics = [#tpu.dimension_semantics<parallel>, #tpu.dimension_semantics<arbitrary>], iteration_bounds = array<i64: 2, 1>, scalar_prefetch = 0 : i64, scratch_operands = 2 : i64, tpu.core_type = #tpu.core_type<tc>, window_params = [{transform_indices = @transform_0, window_bounds = array<i64: 128, 128>}, {transform_indices = @transform_1, window_bounds = array<i64: 128, 128>}, {transform_indices = @transform_2, window_bounds = array<i64: 1, 4, 8, 128>}, {transform_indices = @transform_3, window_bounds = array<i64: 1, 4, 8, 128>}]} {
    %c0_i32 = arith.constant 0 : i32
    %0 = arith.cmpi eq, %arg1, %c0_i32 : i32
    %1 = arith.extui %0 : i1 to i32
    %c0_i32_0 = arith.constant 0 : i32
    %2 = arith.cmpi ne, %1, %c0_i32_0 : i32
    scf.if %2 {
      %cst_21 = arith.constant 0.000000e+00 : f32
      %28 = vector.broadcast %cst_21 : f32 to vector<4x8x128xf32>
      %c0_22 = arith.constant 0 : index
      %c0_23 = arith.constant 0 : index
      %c0_24 = arith.constant 0 : index
      %29 = vector.load %arg6[%c0_22, %c0_23, %c0_24] : memref<4x8x128xf32, #tpu.memory_space<vmem>>, vector<4x8x128xf32>
      tpu.vector_store %arg6[%c0_22, %c0_23, %c0_24], %28 {strides = array<i32>} : memref<4x8x128xf32, #tpu.memory_space<vmem>>, vector<4x8x128xf32>,
      %cst_25 = arith.constant 0.000000e+00 : f32
      %30 = vector.broadcast %cst_25 : f32 to vector<4x8x128xf32>
      %c0_26 = arith.constant 0 : index
      %c0_27 = arith.constant 0 : index
      %c0_28 = arith.constant 0 : index
      %31 = vector.load %arg7[%c0_26, %c0_27, %c0_28] : memref<4x8x128xf32, #tpu.memory_space<vmem>>, vector<4x8x128xf32>
      tpu.vector_store %arg7[%c0_26, %c0_27, %c0_28], %30 {strides = array<i32>} : memref<4x8x128xf32, #tpu.memory_space<vmem>>, vector<4x8x128xf32>,
    } else {
    }
    %c0 = arith.constant 0 : index
    %c0_1 = arith.constant 0 : index
    %3 = vector.load %arg2[%c0, %c0_1] : memref<128x128xf32, #tpu.memory_space<vmem>>, vector<128x128xf32>
    %c0_2 = arith.constant 0 : index
    %c0_3 = arith.constant 0 : index
    %4 = vector.load %arg3[%c0_2, %c0_3] : memref<128x128xf32, #tpu.memory_space<vmem>>, vector<128x128xf32>
    %5 = arith.subf %4, %3 : vector<128x128xf32>
    %6 = math.absf %4 : vector<128x128xf32>
    %7 = arith.mulf %5, %5 : vector<128x128xf32>
    %cst = arith.constant 9.99999993E-9 : f32
    %8 = vector.broadcast %cst : f32 to vector<128x128xf32>
    %9 = arith.addf %6, %8 : vector<128x128xf32>
    %10 = tpu.reciprocal %9 {approx = true} : vector<128x128xf32> -> vector<128x128xf32>
    %11 = math.absf %5 : vector<128x128xf32>
    %12 = arith.mulf %11, %10 : vector<128x128xf32>
    %cst_4 = arith.constant 1.000000e+00 : f32
    %13 = vector.broadcast %cst_4 : f32 to vector<128x128xf32>
    %14 = arith.minimumf %12, %13 : vector<128x128xf32>
    %c0_5 = arith.constant 0 : index
    %c0_6 = arith.constant 0 : index
    %c0_7 = arith.constant 0 : index
    %15 = vector.load %arg6[%c0_5, %c0_6, %c0_7] : memref<4x8x128xf32, #tpu.memory_space<vmem>>, vector<4x8x128xf32>
    %16 = vector.shape_cast %7 : vector<128x128xf32> to vector<4x4x8x128xf32>
    %cst_8 = arith.constant dense<0.000000e+00> : vector<4x8x128xf32>
    %17 = vector.multi_reduction <add>, %16, %cst_8 [0] : vector<4x4x8x128xf32> to vector<4x8x128xf32>
    %18 = arith.addf %15, %17 : vector<4x8x128xf32>
    %c0_9 = arith.constant 0 : index
    %c0_10 = arith.constant 0 : index
    %c0_11 = arith.constant 0 : index
    %19 = vector.load %arg6[%c0_9, %c0_10, %c0_11] : memref<4x8x128xf32, #tpu.memory_space<vmem>>, vector<4x8x128xf32>
    tpu.vector_store %arg6[%c0_9, %c0_10, %c0_11], %18 {strides = array<i32>} : memref<4x8x128xf32, #tpu.memory_space<vmem>>, vector<4x8x128xf32>,
    %c0_12 = arith.constant 0 : index
    %c0_13 = arith.constant 0 : index
    %c0_14 = arith.constant 0 : index
    %20 = vector.load %arg7[%c0_12, %c0_13, %c0_14] : memref<4x8x128xf32, #tpu.memory_space<vmem>>, vector<4x8x128xf32>
    %21 = vector.shape_cast %14 : vector<128x128xf32> to vector<4x4x8x128xf32>
    %cst_15 = arith.constant dense<0.000000e+00> : vector<4x8x128xf32>
    %22 = vector.multi_reduction <add>, %21, %cst_15 [0] : vector<4x4x8x128xf32> to vector<4x8x128xf32>
    %23 = arith.addf %20, %22 : vector<4x8x128xf32>
    %c0_16 = arith.constant 0 : index
    %c0_17 = arith.constant 0 : index
    %c0_18 = arith.constant 0 : index
    %24 = vector.load %arg7[%c0_16, %c0_17, %c0_18] : memref<4x8x128xf32, #tpu.memory_space<vmem>>, vector<4x8x128xf32>
    tpu.vector_store %arg7[%c0_16, %c0_17, %c0_18], %23 {strides = array<i32>} : memref<4x8x128xf32, #tpu.memory_space<vmem>>, vector<4x8x128xf32>,
    %c0_i32_19 = arith.constant 0 : i32
    %25 = arith.cmpi eq, %arg1, %c0_i32_19 : i32
    %26 = arith.extui %25 : i1 to i32
    %c0_i32_20 = arith.constant 0 : i32
    %27 = arith.cmpi ne, %26, %c0_i32_20 : i32
    scf.if %27 {
      %c0_21 = arith.constant 0 : index
      %c0_22 = arith.constant 0 : index
      %c0_23 = arith.constant 0 : index
      %28 = vector.load %arg6[%c0_21, %c0_22, %c0_23] : memref<4x8x128xf32, #tpu.memory_space<vmem>>, vector<4x8x128xf32>
      %c0_24 = arith.constant 0 : index
      %c0_25 = arith.constant 0 : index
      %c0_26 = arith.constant 0 : index
      %c0_27 = arith.constant 0 : index
      %29 = vector.load %arg4[%c0_24, %c0_25, %c0_26, %c0_27] : memref<1x4x8x128xf32, #tpu.memory_space<vmem>>, vector<1x4x8x128xf32>
      %30 = vector.shape_cast %29 : vector<1x4x8x128xf32> to vector<4x8x128xf32>
      %31 = vector.shape_cast %28 : vector<4x8x128xf32> to vector<1x4x8x128xf32>
      tpu.vector_store %arg4[%c0_24, %c0_25, %c0_26, %c0_27], %31 {strides = array<i32>} : memref<1x4x8x128xf32, #tpu.memory_space<vmem>>, vector<1x4x8x128xf32>,
      %c0_28 = arith.constant 0 : index
      %c0_29 = arith.constant 0 : index
      %c0_30 = arith.constant 0 : index
      %32 = vector.load %arg7[%c0_28, %c0_29, %c0_30] : memref<4x8x128xf32, #tpu.memory_space<vmem>>, vector<4x8x128xf32>
      %c0_31 = arith.constant 0 : index
      %c0_32 = arith.constant 0 : index
      %c0_33 = arith.constant 0 : index
      %c0_34 = arith.constant 0 : index
      %33 = vector.load %arg5[%c0_31, %c0_32, %c0_33, %c0_34] : memref<1x4x8x128xf32, #tpu.memory_space<vmem>>, vector<1x4x8x128xf32>
      %34 = vector.shape_cast %33 : vector<1x4x8x128xf32> to vector<4x8x128xf32>
      %35 = vector.shape_cast %32 : vector<4x8x128xf32> to vector<1x4x8x128xf32>
      tpu.vector_store %arg5[%c0_31, %c0_32, %c0_33, %c0_34], %35 {strides = array<i32>} : memref<1x4x8x128xf32, #tpu.memory_space<vmem>>, vector<1x4x8x128xf32>,
    } else {
    }
    return
  }
  func.func @transform_0(%arg0: i32, %arg1: i32) -> (i32, i32) {
    %c1_i32 = arith.constant 1 : i32
    %0 = arith.muli %arg0, %c1_i32 : i32
    %1 = arith.addi %0, %arg1 : i32
    %c0_i32 = arith.constant 0 : i32
    %c0_i32_0 = arith.constant 0 : i32
    return %1, %c0_i32 : i32, i32
  }
  func.func @transform_1(%arg0: i32, %arg1: i32) -> (i32, i32) {
    %c1_i32 = arith.constant 1 : i32
    %0 = arith.muli %arg0, %c1_i32 : i32
    %1 = arith.addi %0, %arg1 : i32
    %c0_i32 = arith.constant 0 : i32
    %c0_i32_0 = arith.constant 0 : i32
    return %1, %c0_i32 : i32, i32
  }
  func.func @transform_2(%arg0: i32, %arg1: i32) -> (i32, i32, i32, i32) {
    %c0_i32 = arith.constant 0 : i32
    %c0_i32_0 = arith.constant 0 : i32
    %c0_i32_1 = arith.constant 0 : i32
    %c0_i32_2 = arith.constant 0 : i32
    return %arg0, %c0_i32, %c0_i32_0, %c0_i32_1 : i32, i32, i32, i32
  }
  func.func @transform_3(%arg0: i32, %arg1: i32) -> (i32, i32, i32, i32) {
    %c0_i32 = arith.constant 0 : i32
    %c0_i32_0 = arith.constant 0 : i32
    %c0_i32_1 = arith.constant 0 : i32
    %c0_i32_2 = arith.constant 0 : i32
    return %arg0, %c0_i32, %c0_i32_0, %c0_i32_1 : i32, i32, i32, i32
  }
}

</mosaic_0001>

<llo_original>
// kernel: tpu_custom_call.1
$region0: #{tpu_custom_call.1}
  #allocation0 [shape = 'u32[]', space=smem, size = 0x4, offset = 0x4, fixed_abs, tag = 'smem constant byte address 0x4 - core index']
  #allocation1 [shape = 'u32[72,128]{1,0:T(1,128)}', space=vmem, size = 0x9000, scoped, tag = 'internal scratch']
  #allocation2 [shape = 'f32[4,8,128]{2,1,0:T(8,128)}', space=vmem, size = 0x4000, scoped, tag = 'scratch operand']
  #allocation3 [shape = 'f32[4,8,128]{2,1,0:T(8,128)}', space=vmem, size = 0x4000, scoped, tag = 'scratch operand']
  %s0 = inlined_call_operand.hbm [shape: f32[256,128], index: 0, kind: input, shape index: {}]
  %s1 = inlined_call_operand.hbm [shape: f32[256,128], index: 1, kind: input, shape index: {}]
  %s2 = inlined_call_operand.hbm [shape: f32[2,4,8,128], index: 2, kind: output, shape index: {0}]
  %s3 = inlined_call_operand.hbm [shape: f32[2,4,8,128], index: 3, kind: output, shape index: {1}]
  %4 = xla_tuple %s2, %s3
  %s5 = sld [smem:[#allocation0]]
  $region65: #{tpu_custom_call.1} parent=0
    _
  %s7 = ssub.s32 1, %s5
  %s8 = scalar_select 0, %s7, %s5
  $region1: #{tpu_custom_call.1} parent=0
    #allocation4 [shape = 'u8[131072]{0}', space=vmem, size = 0x20000, scoped, tag = 'input window, operand 0']
    #allocation5 [shape = 's32[2]{0}', space=sflag, size = 0x8, scoped, tag = 'scoped memory for tpu_custom_call.1']
    #allocation6 [shape = 's32[2]{0}', space=sflag, size = 0x8, scoped, tag = 'scoped memory for tpu_custom_call.1']
    #allocation7 [shape = 'u8[131072]{0}', space=vmem, size = 0x20000, scoped, tag = 'input window, operand 1']
    #allocation8 [shape = 's32[2]{0}', space=sflag, size = 0x8, scoped, tag = 'scoped memory for tpu_custom_call.1']
    #allocation9 [shape = 'u8[32768]{0}', space=vmem, size = 0x8000, scoped, tag = 'output window, operand 0']
    #allocation10 [shape = 'u8[32768]{0}', space=vmem, size = 0x8000, scoped, tag = 'output window, operand 1']
    #allocation11 [shape = 's32[2]{0}', space=sflag, size = 0x8, scoped, tag = 'scoped memory for tpu_custom_call.1']
    %9 = vsyncpa [#allocation5], 0
    %s10 = scalar_lea.sflag [#allocation5], 1
    %11 = vsyncpa %s10, 0
    %12 = vsyncpa [#allocation8], 0
    %s13 = scalar_lea.sflag [#allocation8], 1
    %14 = vsyncpa %s13, 0
    %15 = vsyncpa [#allocation6], 0
    %s16 = scalar_lea.sflag [#allocation6], 1
    %17 = vsyncpa %s16, 0
    %18 = vsyncpa [#allocation11], 0
    %s19 = scalar_lea.sflag [#allocation11], 1
    %20 = vsyncpa %s19, 0
    loop: start=0, step=1, limit=4
    $region2: #{tpu_custom_call.1} parent=1 // loop_pre_header
      _
    $region3: #{tpu_custom_call.1} parent=1 // loop_header
      %s22 = sphi 0, %s26
      %p23 = scmp.ge.s32.totalorder %s22, 4
      %s29 = sphi 0, %s41
      %s30 = sphi 0, %s37
      %s31 = sphi 0, %s29
      %s32 = sphi 0, %s30
      %s33 = sphi 0, %s31
      %s34 = sphi 0, %s32
      %s46 = sphi 0, %s48
      %s49 = sphi 0, %s46
      %s50 = sphi 0, %s49
      %s66 = sphi 0, %s50
      %s74 = sphi 0, %s76
      %s77 = sphi 0, %s74
      %s78 = sphi 0, %s77
      %s94 = sphi 0, %s78
      %s100 = sphi 0, %s102
      %s103 = sphi 0, %s100
      %s104 = sphi 0, %s103
      %s120 = sphi 0, %s104
      %s126 = sphi 0, %s128
      %s129 = sphi 0, %s126
      %s130 = sphi 0, %s129
      %s146 = sphi 0, %s130
    $region4: #{tpu_custom_call.1} parent=1 // loop_header_branch
      %25 = sbr.rel (%p23) target = $region8
    $region5: #{tpu_custom_call.1} parent=1 // loop_body
      %s27 = ssub.s32 %s22, 1
      %s28 = ssub.s32 %s22, 2
      %s35 = sadd.s32 1, %s30
      %p36 = scmp.ge.s32.totalorder %s35, 1
      %s37 = scalar_select %p36, 0, %s35
      %s38 = sadd.s32 1, %s29
      %s39 = scalar_select %p36, %s38, %s29
      %p40 = scmp.ge.s32.totalorder %s39, 2
      %s41 = scalar_select %p40, 0, %s39
      %s42 = sadd.s32 %s29, %s30
      %s43 = sadd.s32 %s41, %s37
      %s44 = ssub.s32 %s42, %s43
      %p45 = scmp.eq.s32.totalorder %s44, 0
      %s47 = sadd.s32 %s46, 1
      %s48 = scalar_select %p45, %s46, %s47
      %p51 = pneg %p45
      %p52 = scmp.eq.s32.totalorder %s22, 1
      %p53 = por %p51, %p52
      %p54 = scmp.ne.s32.totalorder %s46, %s49
      %p55 = scmp.eq.s32.totalorder %s22, 0
      %p56 = por %p54, %p55
      %p57 = scmp.ne.s32.totalorder %s46, %s49
      %p58 = scmp.eq.s32.totalorder %s27, 1
      %p59 = por %p57, %p58
      %p60 = scmp.ne.s32.totalorder %s49, %s50
      %p61 = scmp.eq.s32.totalorder %s27, 0
      %p62 = por %p60, %p61
      %p63 = scmp.ne.s32.totalorder %s49, %s50
      %p64 = scmp.eq.s32.totalorder %s28, 1
      %p65 = por %p63, %p64
      %p67 = scmp.ne.s32.totalorder %s50, %s66
      %p68 = scmp.eq.s32.totalorder %s28, 0
      %p69 = por %p67, %p68
      %s70 = sadd.s32 %s29, %s30
      %s71 = sadd.s32 %s41, %s37
      %s72 = ssub.s32 %s70, %s71
      %p73 = scmp.eq.s32.totalorder %s72, 0
      %s75 = sadd.s32 %s74, 1
      %s76 = scalar_select %p73, %s74, %s75
      %p79 = pneg %p73
      %p80 = scmp.eq.s32.totalorder %s22, 1
      %p81 = por %p79, %p80
      %p82 = scmp.ne.s32.totalorder %s74, %s77
      %p83 = scmp.eq.s32.totalorder %s22, 0
      %p84 = por %p82, %p83
      %p85 = scmp.ne.s32.totalorder %s74, %s77
      %p86 = scmp.eq.s32.totalorder %s27, 1
      %p87 = por %p85, %p86
      %p88 = scmp.ne.s32.totalorder %s77, %s78
      %p89 = scmp.eq.s32.totalorder %s27, 0
      %p90 = por %p88, %p89
      %p91 = scmp.ne.s32.totalorder %s77, %s78
      %p92 = scmp.eq.s32.totalorder %s28, 1
      %p93 = por %p91, %p92
      %p95 = scmp.ne.s32.totalorder %s78, %s94
      %p96 = scmp.eq.s32.totalorder %s28, 0
      %p97 = por %p95, %p96
      %s98 = ssub.s32 %s29, %s41
      %p99 = scmp.eq.s32.totalorder %s98, 0
      %s101 = sadd.s32 %s100, 1
      %s102 = scalar_select %p99, %s100, %s101
      %p105 = pneg %p99
      %p106 = scmp.eq.s32.totalorder %s22, 1
      %p107 = por %p105, %p106
      %p108 = scmp.ne.s32.totalorder %s100, %s103
      %p109 = scmp.eq.s32.totalorder %s22, 0
      %p110 = por %p108, %p109
      %p111 = scmp.ne.s32.totalorder %s100, %s103
      %p112 = scmp.eq.s32.totalorder %s27, 1
      %p113 = por %p111, %p112
      %p114 = scmp.ne.s32.totalorder %s103, %s104
      %p115 = scmp.eq.s32.totalorder %s27, 0
      %p116 = por %p114, %p115
      %p117 = scmp.ne.s32.totalorder %s103, %s104
      %p118 = scmp.eq.s32.totalorder %s28, 1
      %p119 = por %p117, %p118
      %p121 = scmp.ne.s32.totalorder %s104, %s120
      %p122 = scmp.eq.s32.totalorder %s28, 0
      %p123 = por %p121, %p122
      %s124 = ssub.s32 %s29, %s41
      %p125 = scmp.eq.s32.totalorder %s124, 0
      %s127 = sadd.s32 %s126, 1
      %s128 = scalar_select %p125, %s126, %s127
      %p131 = pneg %p125
      %p132 = scmp.eq.s32.totalorder %s22, 1
      %p133 = por %p131, %p132
      %p134 = scmp.ne.s32.totalorder %s126, %s129
      %p135 = scmp.eq.s32.totalorder %s22, 0
      %p136 = por %p134, %p135
      %p137 = scmp.ne.s32.totalorder %s126, %s129
      %p138 = scmp.eq.s32.totalorder %s27, 1
      %p139 = por %p137, %p138
      %p140 = scmp.ne.s32.totalorder %s129, %s130
      %p141 = scmp.eq.s32.totalorder %s27, 0
      %p142 = por %p140, %p141
      %p143 = scmp.ne.s32.totalorder %s129, %s130
      %p144 = scmp.eq.s32.totalorder %s28, 1
      %p145 = por %p143, %p144
      %p147 = scmp.ne.s32.totalorder %s130, %s146
      %p148 = scmp.eq.s32.totalorder %s28, 0
      %p149 = por %p147, %p148
      %p150 = scmp.le.s32.totalorder 1, %s22
      %p151 = scmp.lt.s32.totalorder %s22, 3
      %p152 = pnand %p150, %p151
      %p153 = pneg %p152
      // Predicated region
      $region9: #{tpu_custom_call.1} parent=5 // pred_check
        _
      $region10: #{tpu_custom_call.1} parent=5 // pred_check_branch
        %155 = sbr.rel (%p152) target = $region12
      $region11: #{tpu_custom_call.1} parent=5 // pred_region
        %s156 = ssub.s32 %s22, 1
      $region12: #{tpu_custom_call.1} parent=5 // pred_fallthru
        _
      %p157 = scmp.lt.s32.totalorder %s22, 2
      // Predicated region
      $region13: #{tpu_custom_call.1} parent=5 // pred_check
        %p158 = pneg %p157
      $region14: #{tpu_custom_call.1} parent=5 // pred_check_branch
        %160 = sbr.rel (%p158) target = $region16
      $region15: #{tpu_custom_call.1} parent=5 // pred_region
        // Predicated region
        $region17: #{tpu_custom_call.1} parent=15 // pred_check
          %p161 = pneg %p56
        $region18: #{tpu_custom_call.1} parent=15 // pred_check_branch
          %163 = sbr.rel (%p161) target = $region20
        $region19: #{tpu_custom_call.1} parent=15 // pred_region
          %s164 = sand.u32 %s46, 1
          %s165 = scalar_lea.sflag [#allocation5], %s164
          %s166 = sand.u32 %s46, 1
          %s167 = smul.addr %s166, 128
          %s168 = scalar_lea.vmem [#allocation4], %s167
          %s169 = sadd.s32 %s29, %s30
          %s170 = smul.u32 16, %s169
          %172 = vsyncadd %s165, 0
          %s173 = smul.addr %s170, 8
          %s174 = scalar_lea.hbm %s0, %s173
          %s175 = sshll.u32 %s174, 4
          %s176 = int_to_ptr.hbm [resolvable:$true] %s175
          %s177 = sshll.u32 %s168, 4
          %s178 = int_to_ptr.vmem [resolvable:$true] %s177
          %183 = dma.hbm_to_vmem [thread:$0]  %s176, 2048, %s178, %s165, 128, 128, 8
        $region20: #{tpu_custom_call.1} parent=15 // pred_fallthru
          _
        // Predicated region
        $region21: #{tpu_custom_call.1} parent=15 // pred_check
          %p184 = pneg %p84
        $region22: #{tpu_custom_call.1} parent=15 // pred_check_branch
          %186 = sbr.rel (%p184) target = $region24
        $region23: #{tpu_custom_call.1} parent=15 // pred_region
          %s187 = sand.u32 %s74, 1
          %s188 = scalar_lea.sflag [#allocation8], %s187
          %s189 = sand.u32 %s74, 1
          %s190 = smul.addr %s189, 128
          %s191 = scalar_lea.vmem [#allocation7], %s190
          %s192 = sadd.s32 %s29, %s30
          %s193 = smul.u32 16, %s192
          %195 = vsyncadd %s188, 0
          %s196 = smul.addr %s193, 8
          %s197 = scalar_lea.hbm %s1, %s196
          %s198 = sshll.u32 %s197, 4
          %s199 = int_to_ptr.hbm [resolvable:$true] %s198
          %s200 = sshll.u32 %s191, 4
          %s201 = int_to_ptr.vmem [resolvable:$true] %s200
          %206 = dma.hbm_to_vmem [thread:$0]  %s199, 2048, %s201, %s188, 128, 128, 8
        $region24: #{tpu_custom_call.1} parent=15 // pred_fallthru
          _
      $region16: #{tpu_custom_call.1} parent=5 // pred_fallthru
        _
      %p207 = scmp.le.s32.totalorder 1, %s22
      %p208 = scmp.lt.s32.totalorder %s22, 3
      %p209 = pnand %p207, %p208
      %p210 = pneg %p209
      // Predicated region
      $region25: #{tpu_custom_call.1} parent=5 // pred_check
        _
      $region26: #{tpu_custom_call.1} parent=5 // pred_check_branch
        %212 = sbr.rel (%p209) target = $region28
      $region27: #{tpu_custom_call.1} parent=5 // pred_region
        %s213 = ssub.s32 %s22, 1
        %s214 = sand.u32 %s49, 1
        %s215 = scalar_lea.sflag [#allocation5], %s214
        %s216 = sand.u32 %s49, 1
        %s217 = smul.addr %s216, 128
        %s218 = scalar_lea.vmem [#allocation4], %s217
        // Predicated region
        $region29: #{tpu_custom_call.1} parent=27 // pred_check
          %p219 = pneg %p62
        $region30: #{tpu_custom_call.1} parent=27 // pred_check_branch
          %221 = sbr.rel (%p219) target = $region32
        $region31: #{tpu_custom_call.1} parent=27 // pred_region
          %223 = dma.done %s215, 2048
        $region32: #{tpu_custom_call.1} parent=27 // pred_fallthru
          _
        %s224 = sand.u32 %s77, 1
        %s225 = scalar_lea.sflag [#allocation8], %s224
        %s226 = sand.u32 %s77, 1
        %s227 = smul.addr %s226, 128
        %s228 = scalar_lea.vmem [#allocation7], %s227
        // Predicated region
        $region33: #{tpu_custom_call.1} parent=27 // pred_check
          %p229 = pneg %p90
        $region34: #{tpu_custom_call.1} parent=27 // pred_check_branch
          %231 = sbr.rel (%p229) target = $region36
        $region35: #{tpu_custom_call.1} parent=27 // pred_region
          %233 = dma.done %s225, 2048
        $region36: #{tpu_custom_call.1} parent=27 // pred_fallthru
          _
        %s234 = sand.u32 %s49, 1
        %s235 = scalar_lea.sflag [#allocation5], %s234
        %s236 = sand.u32 %s49, 1
        %s237 = smul.addr %s236, 128
        %s238 = scalar_lea.vmem [#allocation4], %s237
        %p239 = pneg %p62
        %p240 = pneg %p59
        %s241 = sand.u32 %s77, 1
        %s242 = scalar_lea.sflag [#allocation8], %s241
        %s243 = sand.u32 %s77, 1
        %s244 = smul.addr %s243, 128
        %s245 = scalar_lea.vmem [#allocation7], %s244
        %p246 = pneg %p90
        %p247 = pneg %p87
        %p248 = pneg %p116
        %p249 = pneg %p113
        %s250 = sand.u32 %s103, 1
        %s251 = scalar_lea.sflag [#allocation6], %s250
        %s252 = sand.u32 %s103, 1
        %s253 = smul.addr %s252, 32
        %s254 = scalar_lea.vmem [#allocation9], %s253
        %p255 = pneg %p142
        %p256 = pneg %p139
        %s257 = sand.u32 %s129, 1
        %s258 = scalar_lea.sflag [#allocation11], %s257
        %s259 = sand.u32 %s129, 1
        %s260 = smul.addr %s259, 32
        %s261 = scalar_lea.vmem [#allocation10], %s260
        %s262 = sadd.s32 %s31, %s32
        %s263 = smul.u32 16, %s262
        %s264 = sadd.s32 %s31, %s32
        %s265 = smul.u32 16, %s264
        %p266 = scmp.eq.s32.totalorder %s32, 0
        // Predicated region
        $region37: #{tpu_custom_call.1} parent=27 // pred_check
          %p267 = pneg %p266
        $region38: #{tpu_custom_call.1} parent=27 // pred_check_branch
          %269 = sbr.rel (%p267) target = $region40
        $region39: #{tpu_custom_call.1} parent=27 // pred_region
          %270 = vst [vmem:[#allocation2] sm:$0xff] 0.0
          %271 = vst [vmem:[#allocation2 + $0x8] sm:$0xff] 0.0
          %272 = vst [vmem:[#allocation2 + $0x10] sm:$0xff] 0.0
          %273 = vst [vmem:[#allocation2 + $0x18] sm:$0xff] 0.0
          %274 = vst [vmem:[#allocation3] sm:$0xff] 0.0
          %275 = vst [vmem:[#allocation3 + $0x8] sm:$0xff] 0.0
          %276 = vst [vmem:[#allocation3 + $0x10] sm:$0xff] 0.0
          %277 = vst [vmem:[#allocation3 + $0x18] sm:$0xff] 0.0
        $region40: #{tpu_custom_call.1} parent=27 // pred_fallthru
          _
        %v278 = vld [vmem:[%s218] sm:$0xff]
        %v279 = vld [vmem:[%s218 + $0x8] sm:$0xff]
        %v280 = vld [vmem:[%s218 + $0x10] sm:$0xff]
        %v281 = vld [vmem:[%s218 + $0x18] sm:$0xff]
        %v282 = vld [vmem:[%s218 + $0x20] sm:$0xff]
        %v283 = vld [vmem:[%s218 + $0x28] sm:$0xff]
        %v284 = vld [vmem:[%s218 + $0x30] sm:$0xff]
        %v285 = vld [vmem:[%s218 + $0x38] sm:$0xff]
        %v286 = vld [vmem:[%s218 + $0x40] sm:$0xff]
        %v287 = vld [vmem:[%s218 + $0x48] sm:$0xff]
        %v288 = vld [vmem:[%s218 + $0x50] sm:$0xff]
        %v289 = vld [vmem:[%s218 + $0x58] sm:$0xff]
        %v290 = vld [vmem:[%s218 + $0x60] sm:$0xff]
        %v291 = vld [vmem:[%s218 + $0x68] sm:$0xff]
        %v292 = vld [vmem:[%s218 + $0x70] sm:$0xff]
        %v293 = vld [vmem:[%s218 + $0x78] sm:$0xff]
        %v294 = vld [vmem:[%s228] sm:$0xff]
        %v295 = vld [vmem:[%s228 + $0x8] sm:$0xff]
        %v296 = vld [vmem:[%s228 + $0x10] sm:$0xff]
        %v297 = vld [vmem:[%s228 + $0x18] sm:$0xff]
        %v298 = vld [vmem:[%s228 + $0x20] sm:$0xff]
        %v299 = vld [vmem:[%s228 + $0x28] sm:$0xff]
        %v300 = vld [vmem:[%s228 + $0x30] sm:$0xff]
        %v301 = vld [vmem:[%s228 + $0x38] sm:$0xff]
        %v302 = vld [vmem:[%s228 + $0x40] sm:$0xff]
        %v303 = vld [vmem:[%s228 + $0x48] sm:$0xff]
        %v304 = vld [vmem:[%s228 + $0x50] sm:$0xff]
        %v305 = vld [vmem:[%s228 + $0x58] sm:$0xff]
        %v306 = vld [vmem:[%s228 + $0x60] sm:$0xff]
        %v307 = vld [vmem:[%s228 + $0x68] sm:$0xff]
        %v308 = vld [vmem:[%s228 + $0x70] sm:$0xff]
        %v309 = vld [vmem:[%s228 + $0x78] sm:$0xff]
        %v310 = vsub.f32 %v294, %v278
        %v311 = vsub.f32 %v295, %v279
        %v312 = vsub.f32 %v296, %v280
        %v313 = vsub.f32 %v297, %v281
        %v314 = vsub.f32 %v298, %v282
        %v315 = vsub.f32 %v299, %v283
        %v316 = vsub.f32 %v300, %v284
        %v317 = vsub.f32 %v301, %v285
        %v318 = vsub.f32 %v302, %v286
        %v319 = vsub.f32 %v303, %v287
        %v320 = vsub.f32 %v304, %v288
        %v321 = vsub.f32 %v305, %v289
        %v322 = vsub.f32 %v306, %v290
        %v323 = vsub.f32 %v307, %v291
        %v324 = vsub.f32 %v308, %v292
        %v325 = vsub.f32 %v309, %v293
        %v326 = vand.u32 2147483647, %v294
        %v327 = vand.u32 2147483647, %v295
        %v328 = vand.u32 2147483647, %v296
        %v329 = vand.u32 2147483647, %v297
        %v330 = vand.u32 2147483647, %v298
        %v331 = vand.u32 2147483647, %v299
        %v332 = vand.u32 2147483647, %v300
        %v333 = vand.u32 2147483647, %v301
        %v334 = vand.u32 2147483647, %v302
        %v335 = vand.u32 2147483647, %v303
        %v336 = vand.u32 2147483647, %v304
        %v337 = vand.u32 2147483647, %v305
        %v338 = vand.u32 2147483647, %v306
        %v339 = vand.u32 2147483647, %v307
        %v340 = vand.u32 2147483647, %v308
        %v341 = vand.u32 2147483647, %v309
        %v342 = vmul.f32 %v310, %v310
        %v343 = vmul.f32 %v311, %v311
        %v344 = vmul.f32 %v312, %v312
        %v345 = vmul.f32 %v313, %v313
        %v346 = vmul.f32 %v314, %v314
        %v347 = vmul.f32 %v315, %v315
        %v348 = vmul.f32 %v316, %v316
        %v349 = vmul.f32 %v317, %v317
        %v350 = vmul.f32 %v318, %v318
        %v351 = vmul.f32 %v319, %v319
        %v352 = vmul.f32 %v320, %v320
        %v353 = vmul.f32 %v321, %v321
        %v354 = vmul.f32 %v322, %v322
        %v355 = vmul.f32 %v323, %v323
        %v356 = vmul.f32 %v324, %v324
        %v357 = vmul.f32 %v325, %v325
        %v358 = vadd.f32 %v326, 1e-08
        %v359 = vadd.f32 %v327, 1e-08
        %v360 = vadd.f32 %v328, 1e-08
        %v361 = vadd.f32 %v329, 1e-08
        %v362 = vadd.f32 %v330, 1e-08
        %v363 = vadd.f32 %v331, 1e-08
        %v364 = vadd.f32 %v332, 1e-08
        %v365 = vadd.f32 %v333, 1e-08
        %v366 = vadd.f32 %v334, 1e-08
        %v367 = vadd.f32 %v335, 1e-08
        %v368 = vadd.f32 %v336, 1e-08
        %v369 = vadd.f32 %v337, 1e-08
        %v370 = vadd.f32 %v338, 1e-08
        %v371 = vadd.f32 %v339, 1e-08
        %v372 = vadd.f32 %v340, 1e-08
        %v373 = vadd.f32 %v341, 1e-08
        %v374 = vrcp.pop %v358
        %v375 = vrcp.pop %v359
        %v376 = vrcp.pop %v360
        %v377 = vrcp.pop %v361
        %v378 = vrcp.pop %v362
        %v379 = vrcp.pop %v363
        %v380 = vrcp.pop %v364
        %v381 = vrcp.pop %v365
        %v382 = vrcp.pop %v366
        %v383 = vrcp.pop %v367
        %v384 = vrcp.pop %v368
        %v385 = vrcp.pop %v369
        %v386 = vrcp.pop %v370
        %v387 = vrcp.pop %v371
        %v388 = vrcp.pop %v372
        %v389 = vrcp.pop %v373
        %v390 = vand.u32 2147483647, %v310
        %v391 = vand.u32 2147483647, %v311
        %v392 = vand.u32 2147483647, %v312
        %v393 = vand.u32 2147483647, %v313
        %v394 = vand.u32 2147483647, %v314
        %v395 = vand.u32 2147483647, %v315
        %v396 = vand.u32 2147483647, %v316
        %v397 = vand.u32 2147483647, %v317
        %v398 = vand.u32 2147483647, %v318
        %v399 = vand.u32 2147483647, %v319
        %v400 = vand.u32 2147483647, %v320
        %v401 = vand.u32 2147483647, %v321
        %v402 = vand.u32 2147483647, %v322
        %v403 = vand.u32 2147483647, %v323
        %v404 = vand.u32 2147483647, %v324
        %v405 = vand.u32 2147483647, %v325
        %v406 = vmul.f32 %v390, %v374
        %v407 = vmul.f32 %v391, %v375
        %v408 = vmul.f32 %v392, %v376
        %v409 = vmul.f32 %v393, %v377
        %v410 = vmul.f32 %v394, %v378
        %v411 = vmul.f32 %v395, %v379
        %v412 = vmul.f32 %v396, %v380
        %v413 = vmul.f32 %v397, %v381
        %v414 = vmul.f32 %v398, %v382
        %v415 = vmul.f32 %v399, %v383
        %v416 = vmul.f32 %v400, %v384
        %v417 = vmul.f32 %v401, %v385
        %v418 = vmul.f32 %v402, %v386
        %v419 = vmul.f32 %v403, %v387
        %v420 = vmul.f32 %v404, %v388
        %v421 = vmul.f32 %v405, %v389
        %v422 = vmin.f32 %v406, 1.0
        %v423 = vmin.f32 %v407, 1.0
        %v424 = vmin.f32 %v408, 1.0
        %v425 = vmin.f32 %v409, 1.0
        %v426 = vmin.f32 %v410, 1.0
        %v427 = vmin.f32 %v411, 1.0
        %v428 = vmin.f32 %v412, 1.0
        %v429 = vmin.f32 %v413, 1.0
        %v430 = vmin.f32 %v414, 1.0
        %v431 = vmin.f32 %v415, 1.0
        %v432 = vmin.f32 %v416, 1.0
        %v433 = vmin.f32 %v417, 1.0
        %v434 = vmin.f32 %v418, 1.0
        %v435 = vmin.f32 %v419, 1.0
        %v436 = vmin.f32 %v420, 1.0
        %v437 = vmin.f32 %v421, 1.0
        %v438 = vld [vmem:[#allocation2] sm:$0xff]
        %v439 = vld [vmem:[#allocation2 + $0x8] sm:$0xff]
        %v440 = vld [vmem:[#allocation2 + $0x10] sm:$0xff]
        %v441 = vld [vmem:[#allocation2 + $0x18] sm:$0xff]
        %v442 = vadd.f32 %v342, %v346
        %v443 = vadd.f32 %v442, %v350
        %v444 = vadd.f32 %v443, %v354
        %v445 = vadd.f32 %v343, %v347
        %v446 = vadd.f32 %v445, %v351
        %v447 = vadd.f32 %v446, %v355
        %v448 = vadd.f32 %v344, %v348
        %v449 = vadd.f32 %v448, %v352
        %v450 = vadd.f32 %v449, %v356
        %v451 = vadd.f32 %v345, %v349
        %v452 = vadd.f32 %v451, %v353
        %v453 = vadd.f32 %v452, %v357
        %v454 = vadd.f32 %v438, %v444
        %v455 = vadd.f32 %v439, %v447
        %v456 = vadd.f32 %v440, %v450
        %v457 = vadd.f32 %v441, %v453
        %458 = vst [vmem:[#allocation2] sm:$0xff] %v454
        %459 = vst [vmem:[#allocation2 + $0x8] sm:$0xff] %v455
        %460 = vst [vmem:[#allocation2 + $0x10] sm:$0xff] %v456
        %461 = vst [vmem:[#allocation2 + $0x18] sm:$0xff] %v457
        %v462 = vld [vmem:[#allocation3] sm:$0xff]
        %v463 = vld [vmem:[#allocation3 + $0x8] sm:$0xff]
        %v464 = vld [vmem:[#allocation3 + $0x10] sm:$0xff]
        %v465 = vld [vmem:[#allocation3 + $0x18] sm:$0xff]
        %v466 = vadd.f32 %v422, %v426
        %v467 = vadd.f32 %v466, %v430
        %v468 = vadd.f32 %v467, %v434
        %v469 = vadd.f32 %v423, %v427
        %v470 = vadd.f32 %v469, %v431
        %v471 = vadd.f32 %v470, %v435
        %v472 = vadd.f32 %v424, %v428
        %v473 = vadd.f32 %v472, %v432
        %v474 = vadd.f32 %v473, %v436
        %v475 = vadd.f32 %v425, %v429
        %v476 = vadd.f32 %v475, %v433
        %v477 = vadd.f32 %v476, %v437
        %v478 = vadd.f32 %v462, %v468
        %v479 = vadd.f32 %v463, %v471
        %v480 = vadd.f32 %v464, %v474
        %v481 = vadd.f32 %v465, %v477
        %482 = vst [vmem:[#allocation3] sm:$0xff] %v478
        %483 = vst [vmem:[#allocation3 + $0x8] sm:$0xff] %v479
        %484 = vst [vmem:[#allocation3 + $0x10] sm:$0xff] %v480
        %485 = vst [vmem:[#allocation3 + $0x18] sm:$0xff] %v481
        // Predicated region
        $region41: #{tpu_custom_call.1} parent=27 // pred_check
          %p486 = pneg %p266
        $region42: #{tpu_custom_call.1} parent=27 // pred_check_branch
          %488 = sbr.rel (%p486) target = $region44
        $region43: #{tpu_custom_call.1} parent=27 // pred_region
          %v489 = vld [vmem:[#allocation2] sm:$0xff]
          %v490 = vld [vmem:[#allocation2 + $0x8] sm:$0xff]
          %v491 = vld [vmem:[#allocation2 + $0x10] sm:$0xff]
          %v492 = vld [vmem:[#allocation2 + $0x18] sm:$0xff]
          %493 = vst [vmem:[%s254] sm:$0xff] %v489
          %494 = vst [vmem:[%s254 + $0x8] sm:$0xff] %v490
          %495 = vst [vmem:[%s254 + $0x10] sm:$0xff] %v491
          %496 = vst [vmem:[%s254 + $0x18] sm:$0xff] %v492
          %v497 = vld [vmem:[#allocation3] sm:$0xff]
          %v498 = vld [vmem:[#allocation3 + $0x8] sm:$0xff]
          %v499 = vld [vmem:[#allocation3 + $0x10] sm:$0xff]
          %v500 = vld [vmem:[#allocation3 + $0x18] sm:$0xff]
          %501 = vst [vmem:[%s261] sm:$0xff] %v497
          %502 = vst [vmem:[%s261 + $0x8] sm:$0xff] %v498
          %503 = vst [vmem:[%s261 + $0x10] sm:$0xff] %v499
          %504 = vst [vmem:[%s261 + $0x18] sm:$0xff] %v500
        $region44: #{tpu_custom_call.1} parent=27 // pred_fallthru
          _
        %s505 = sand.u32 %s103, 1
        %s506 = scalar_lea.sflag [#allocation6], %s505
        %s507 = sand.u32 %s103, 1
        %s508 = smul.addr %s507, 32
        %s509 = scalar_lea.vmem [#allocation9], %s508
        %s510 = sand.u32 %s129, 1
        %s511 = scalar_lea.sflag [#allocation11], %s510
        %s512 = sand.u32 %s129, 1
        %s513 = smul.addr %s512, 32
        %s514 = scalar_lea.vmem [#allocation10], %s513
        // Predicated region
        $region45: #{tpu_custom_call.1} parent=27 // pred_check
          %p515 = pneg %p113
        $region46: #{tpu_custom_call.1} parent=27 // pred_check_branch
          %517 = sbr.rel (%p515) target = $region48
        $region47: #{tpu_custom_call.1} parent=27 // pred_region
          %519 = vsyncadd %s506, 0
          %s520 = smul.addr %s31, 4
          %s521 = smul.addr %s520, 8
          %s522 = scalar_lea.hbm %s2, %s521
          %s523 = sshll.u32 %s509, 4
          %s524 = int_to_ptr.vmem [resolvable:$true] %s523
          %s525 = sshll.u32 %s522, 4
          %s526 = int_to_ptr.hbm [resolvable:$true] %s525
          %531 = dma.vmem_to_hbm [thread:$0]  %s524, 512, %s526, %s506, 128, 128, 8
        $region48: #{tpu_custom_call.1} parent=27 // pred_fallthru
          _
        // Predicated region
        $region49: #{tpu_custom_call.1} parent=27 // pred_check
          %p532 = pneg %p139
        $region50: #{tpu_custom_call.1} parent=27 // pred_check_branch
          %534 = sbr.rel (%p532) target = $region52
        $region51: #{tpu_custom_call.1} parent=27 // pred_region
          %536 = vsyncadd %s511, 0
          %s537 = smul.addr %s31, 4
          %s538 = smul.addr %s537, 8
          %s539 = scalar_lea.hbm %s3, %s538
          %s540 = sshll.u32 %s514, 4
          %s541 = int_to_ptr.vmem [resolvable:$true] %s540
          %s542 = sshll.u32 %s539, 4
          %s543 = int_to_ptr.hbm [resolvable:$true] %s542
          %548 = dma.vmem_to_hbm [thread:$0]  %s541, 512, %s543, %s511, 128, 128, 8
        $region52: #{tpu_custom_call.1} parent=27 // pred_fallthru
          _
      $region28: #{tpu_custom_call.1} parent=5 // pred_fallthru
        _
      %p549 = scmp.le.s32.totalorder 2, %s22
      // Predicated region
      $region53: #{tpu_custom_call.1} parent=5 // pred_check
        %p550 = pneg %p549
      $region54: #{tpu_custom_call.1} parent=5 // pred_check_branch
        %552 = sbr.rel (%p550) target = $region56
      $region55: #{tpu_custom_call.1} parent=5 // pred_region
        %s553 = ssub.s32 %s22, 2
        // Predicated region
        $region57: #{tpu_custom_call.1} parent=55 // pred_check
          %p554 = pneg %p119
        $region58: #{tpu_custom_call.1} parent=55 // pred_check_branch
          %556 = sbr.rel (%p554) target = $region60
        $region59: #{tpu_custom_call.1} parent=55 // pred_region
          %s557 = sand.u32 %s104, 1
          %s558 = scalar_lea.sflag [#allocation6], %s557
          %s559 = sand.u32 %s104, 1
          %s560 = smul.addr %s559, 32
          %s561 = scalar_lea.vmem [#allocation9], %s560
          %563 = dma.done %s558, 512
        $region60: #{tpu_custom_call.1} parent=55 // pred_fallthru
          _
        // Predicated region
        $region61: #{tpu_custom_call.1} parent=55 // pred_check
          %p564 = pneg %p145
        $region62: #{tpu_custom_call.1} parent=55 // pred_check_branch
          %566 = sbr.rel (%p564) target = $region64
        $region63: #{tpu_custom_call.1} parent=55 // pred_region
          %s567 = sand.u32 %s130, 1
          %s568 = scalar_lea.sflag [#allocation11], %s567
          %s569 = sand.u32 %s130, 1
          %s570 = smul.addr %s569, 32
          %s571 = scalar_lea.vmem [#allocation10], %s570
          %573 = dma.done %s568, 512
        $region64: #{tpu_custom_call.1} parent=55 // pred_fallthru
          _
      $region56: #{tpu_custom_call.1} parent=5 // pred_fallthru
        _
    $region6: #{tpu_custom_call.1} parent=1 // loop_footer
      %s26 = sadd.s32 1, %s22
    $region7: #{tpu_custom_call.1} parent=1 // loop_footer_branch
      %21 = sbr.rel target = $region3
    $region8: #{tpu_custom_call.1} parent=1 // loop_exit
      _
    %574 = vsyncpa [#allocation5], 1
    %s575 = scalar_lea.sflag [#allocation5], 1
    %576 = vsyncpa %s575, 1
    %577 = vsyncpa [#allocation8], 1
    %s578 = scalar_lea.sflag [#allocation8], 1
    %579 = vsyncpa %s578, 1
    %580 = vsyncpa [#allocation6], 1
    %s581 = scalar_lea.sflag [#allocation6], 1
    %582 = vsyncpa %s581, 1
    %583 = vsyncpa [#allocation11], 1
    %s584 = scalar_lea.sflag [#allocation11], 1
    %585 = vsyncpa %s584, 1

</llo_original>
